<compile_context>
chip_gen: v5e
topology: v5e:2x2
jax: 0.10.0
libtpu: 0.0.40
codegen_flags: <defaults>
</compile_context>

<pallas_src>
import jax
import jax.numpy as jnp
from jax.experimental import pallas as pl
from jax.experimental.pallas import tpu as pltpu


def _ext_attn_kernel(x_ref, wk_bd_ref, wv_bd_ref, affine_ref, o_ref):
    # x_ref block: (B_BLK, N, Cpad).  Weights: (Cpad, G*S) / (G*S, Cpad), block-diag.
    b_blk, n, c_pad = x_ref.shape
    gs = wk_bd_ref.shape[1]

    # ---- matmul 1: attn = x @ Wk_bd (MXU, f32 accumulate) -------------------
    x2 = x_ref[...].reshape(b_blk * n, c_pad)
    attn = jnp.dot(x2, wk_bd_ref[...],
                   preferred_element_type=jnp.float32)          # (B_BLK*N, GS) f32
    attn3 = attn.reshape(b_blk, n, gs)

    # ---- GroupNorm(32, 32): per-(sample, channel) stats over the N tokens ---
    # One-pass statistics: mean = s1/N, var = s2/N - mean^2 (biased, eps=1e-5).
    inv_n = jnp.float32(1.0 / n)
    s1 = jnp.sum(attn3, axis=1, keepdims=True)                  # (B_BLK, 1, GS)
    s2 = jnp.sum(attn3 * attn3, axis=1, keepdims=True)          # (B_BLK, 1, GS)
    mean = s1 * inv_n
    var = s2 * inv_n - mean * mean

    # sweight/sbias are folded into the GN affine at prepare time:
    #   gate_arg = a * (attn - mean) * rsqrt(var + eps) + b
    a_aff = affine_ref[0:1, :]                                  # (1, GS) f32
    b_aff = affine_ref[1:2, :]                                  # (1, GS) f32
    scale = a_aff * jax.lax.rsqrt(var + 1e-5)                   # (B_BLK, 1, GS)
    gate = jax.nn.sigmoid((attn3 - mean) * scale + b_aff)       # f32, EUP
    gated = (attn3 * gate).reshape(b_blk * n, gs)

    # ---- matmul 2: out = gated @ Wv_bd (MXU, f32 accumulate) ----------------
    out = jnp.dot(gated.astype(wv_bd_ref.dtype), wv_bd_ref[...],
                  preferred_element_type=jnp.float32)           # (B_BLK*N, Cpad)
    o_ref[...] = out.reshape(b_blk, n, c_pad).astype(o_ref.dtype)


def _choose_batch_block(b, n, *, target_rows=256, max_block=16):
    """Largest useful batch block: keep >=2 grid steps (v7x megacore), cap VMEM,
    and stop growing once the MXU LHS already has >= target_rows rows."""
    divisors = [d for d in range(1, b + 1) if b % d == 0 and d <= max_block]
    if b >= 2:
        divisors = [d for d in divisors if b // d >= 2] or [1]
    for d in divisors:
        if d * n >= target_rows:
            return d
    return divisors[-1]


def prepare_external_attention_params(wk, wv, sweight, sbias, gn_gamma, gn_beta,
                                      *, d_model, G=8, mxu_dtype=jnp.bfloat16):
    """One-time weight preprocessing (hoisted out of the per-forward path).

    wk: (S, c//G) = mk.weight, wv: (c//G, S) = mv.weight.
    Returns block-diagonal, channel-padded weights + packed GN affine.
    """
    c = d_model
    assert c % G == 0
    S = wk.shape[0]
    GS = G * S
    c_pad = ((c + 127) // 128) * 128
    assert GS % 128 == 0, "G*S must be a multiple of 128 for lane-dense tiles"

    eye = jnp.eye(G, dtype=jnp.float32)
    wk_bd = jnp.kron(eye, wk.T.astype(jnp.float32))              # (c, GS)
    wv_bd = jnp.kron(eye, wv.T.astype(jnp.float32))              # (GS, c)
    # Zero-pad to lane-dense channel width (extra rows/cols are exact zeros).
    wk_bd = jnp.pad(wk_bd, ((0, c_pad - c), (0, 0))).astype(mxu_dtype)
    wv_bd = jnp.pad(wv_bd, ((0, 0), (0, c_pad - c))).astype(mxu_dtype)

    # Fold sweight/sbias into the GroupNorm affine and tile across groups:
    #   spatial = a * gn_hat + b,  a = sweight*gamma, b = sweight*beta + sbias
    sw = sweight.reshape(S).astype(jnp.float32)
    sb = sbias.reshape(S).astype(jnp.float32)
    gamma = gn_gamma.reshape(S).astype(jnp.float32)
    beta = gn_beta.reshape(S).astype(jnp.float32)
    a_vec = jnp.tile(sw * gamma, G)                              # (GS,)
    b_vec = jnp.tile(sw * beta + sb, G)                          # (GS,)
    affine = jnp.stack([a_vec, b_vec], axis=0)                   # (2, GS) f32

    return {"wk_bd": wk_bd, "wv_bd": wv_bd, "affine": affine,
            "G": G, "S": S, "c": c, "c_pad": c_pad, "mxu_dtype": mxu_dtype}


def external_attention(x, params):
    """x: (b, h, w, c) NHWC.  Returns (b, h, w, c) in x.dtype."""
    b, h, w, c = x.shape
    assert c == params["c"]
    c_pad = params["c_pad"]
    GS = params["G"] * params["S"]
    N = h * w
    mxu_dtype = params["mxu_dtype"]
    out_dtype = x.dtype

    # NHWC flattens directly (group-major channels); pad channels to lane width.
    xt = x.reshape(b, N, c)
    if c_pad != c:
        xt = jnp.pad(xt, ((0, 0), (0, 0), (0, c_pad - c)))
    xt = xt.astype(mxu_dtype)

    b_blk = _choose_batch_block(b, N)
    grid = (b // b_blk,)

    w_item = jnp.dtype(mxu_dtype).itemsize
    cost = pl.CostEstimate(
        flops=4 * b * N * c_pad * GS,                  # two matmuls
        transcendentals=b * N * GS + b * GS,           # sigmoid + rsqrt
        bytes_accessed=(b * N * c_pad) * w_item
                       + (b * N * c_pad) * jnp.dtype(out_dtype).itemsize
                       + (params["wk_bd"].size + params["wv_bd"].size) * w_item
                       + params["affine"].size * 4,
    )

    out = pl.pallas_call(
        _ext_attn_kernel,
        out_shape=jax.ShapeDtypeStruct((b, N, c_pad), out_dtype),
        grid_spec=pltpu.PrefetchScalarGridSpec(
            num_scalar_prefetch=0,
            grid=grid,
            in_specs=[
                pl.BlockSpec((b_blk, N, c_pad), lambda i: (i, 0, 0)),  # samples
                pl.BlockSpec((c_pad, GS), lambda i: (0, 0)),           # Wk block-diag
                pl.BlockSpec((GS, c_pad), lambda i: (0, 0)),           # Wv block-diag
                pl.BlockSpec((2, GS), lambda i: (0, 0)),               # packed affine
            ],
            out_specs=pl.BlockSpec((b_blk, N, c_pad), lambda i: (i, 0, 0)),
        ),
        compiler_params=pltpu.CompilerParams(
            dimension_semantics=("parallel",)),
        cost_estimate=cost,
    )(xt, params["wk_bd"], params["wv_bd"], params["affine"])

    return out[:, :, :c].reshape(b, h, w, c)


def _reference(x, wk, wv, sweight, sbias, gn_gamma, gn_beta, *, G=8):
    # Pure-JAX reference mirroring the PyTorch forward exactly (per-group form).
    b, h, w, c = x.shape
    cg = c // G
    S = wk.shape[0]
    hp = jax.lax.Precision.HIGHEST
    q = x.reshape(b, h, w, G, cg).transpose(0, 3, 1, 2, 4).reshape(b * G, h, w, cg)
    attn = jnp.einsum("bhwc,sc->bhws", q, wk, precision=hp)       # (bG, h, w, S)
    a = attn.transpose(0, 3, 1, 2)                                 # (bG, S, h, w)
    mean = jnp.mean(a, axis=(2, 3), keepdims=True)
    var = jnp.mean((a - mean) ** 2, axis=(2, 3), keepdims=True)
    gn = (a - mean) / jnp.sqrt(var + 1e-5)
    gn = gn * gn_gamma.reshape(1, S, 1, 1) + gn_beta.reshape(1, S, 1, 1)
    spatial = sweight.reshape(1, S, 1, 1) * gn + sbias.reshape(1, S, 1, 1)
    a = a * jax.nn.sigmoid(spatial)
    a = a.transpose(0, 2, 3, 1)                                    # (bG, h, w, S)
    out = jnp.einsum("bhws,cs->bhwc", a, wv, precision=hp)         # (bG, h, w, cg)
    out = out.reshape(b, G, h, w, cg).transpose(0, 2, 3, 1, 4).reshape(b, h, w, c)
    return out


if __name__ == "__main__":
    # Small shapes consistent with the module: d_model = 64, G = 8, S = 32.
    b, h, w, c = 2, 8, 8, 64
    G, S = 8, 32
    cg = c // G

    key = jax.random.PRNGKey(0)
    kx, kk, kv, ks1, ks2, kg1, kg2 = jax.random.split(key, 7)

    x = jax.random.normal(kx, (b, h, w, c), dtype=jnp.float32)

    # nn.Linear weights per init_weights(): normal(std=0.001), bias=None.
    wk = 0.001 * jax.random.normal(kk, (S, cg), dtype=jnp.float32)   # mk.weight
    wv = 0.001 * jax.random.normal(kv, (cg, S), dtype=jnp.float32)   # mv.weight

    # --- Check 1: non-trivial GN/gate parameters, exact f32 MXU path ----------
    sweight_r = 0.5 * jax.random.normal(ks1, (S,), dtype=jnp.float32)
    sbias_r = 0.1 * jax.random.normal(ks2, (S,), dtype=jnp.float32)
    gamma_r = 1.0 + 0.1 * jax.random.normal(kg1, (S,), dtype=jnp.float32)
    beta_r = 0.1 * jax.random.normal(kg2, (S,), dtype=jnp.float32)

    params_f32 = prepare_external_attention_params(
        wk, wv, sweight_r, sbias_r, gamma_r, beta_r,
        d_model=c, G=G, mxu_dtype=jnp.float32)
    out_f32 = jax.block_until_ready(external_attention(x, params_f32))
    ref_r = _reference(x, wk, wv, sweight_r, sbias_r, gamma_r, beta_r, G=G)
    assert out_f32.shape == (b, h, w, c)
    assert jnp.allclose(out_f32, ref_r, atol=1e-6, rtol=1e-4), \
        "f32 path mismatch vs reference"

    # --- Check 2: module-init parameters, default bf16 MXU-operand path -------
    # sweight = zeros(1,32,1,1), sbias = ones(1,32,1,1); GroupNorm affine defaults.
    sweight = jnp.zeros((S,), dtype=jnp.float32)
    sbias = jnp.ones((S,), dtype=jnp.float32)
    gn_gamma = jnp.ones((S,), dtype=jnp.float32)
    gn_beta = jnp.zeros((S,), dtype=jnp.float32)

    params_bf16 = prepare_external_attention_params(
        wk, wv, sweight, sbias, gn_gamma, gn_beta,
        d_model=c, G=G, mxu_dtype=jnp.bfloat16)
    out_bf16 = jax.block_until_ready(external_attention(x, params_bf16))
    ref = _reference(x, wk, wv, sweight, sbias, gn_gamma, gn_beta, G=G)
    assert out_bf16.shape == (b, h, w, c)
    assert jnp.allclose(out_bf16, ref, atol=1e-5, rtol=5e-2), \
        "bf16 path mismatch vs reference"

    print("KERNEL_OK")
</pallas_src>

<mosaic_0001>
module attributes {stable_mosaic.version = 11 : i64} {
  func.func @_ext_attn_kernel(%arg0: i32, %arg1: memref<1x64x128xf32, #tpu.memory_space<vmem>>, %arg2: memref<128x256xf32, #tpu.memory_space<vmem>>, %arg3: memref<256x128xf32, #tpu.memory_space<vmem>>, %arg4: memref<2x256xf32, #tpu.memory_space<vmem>>, %arg5: memref<1x64x128xf32, #tpu.memory_space<vmem>>) attributes {dimension_semantics = [#tpu.dimension_semantics<parallel>], iteration_bounds = array<i64: 2>, scalar_prefetch = 0 : i64, scratch_operands = 0 : i64, tpu.core_type = #tpu.core_type<tc>, window_params = [{transform_indices = @transform_0, window_bounds = array<i64: 1, 64, 128>}, {pipeline_mode = #tpu.pipeline_mode<synchronous>, transform_indices = @transform_1, window_bounds = array<i64: 128, 256>}, {pipeline_mode = #tpu.pipeline_mode<synchronous>, transform_indices = @transform_2, window_bounds = array<i64: 256, 128>}, {pipeline_mode = #tpu.pipeline_mode<synchronous>, transform_indices = @transform_3, window_bounds = array<i64: 2, 256>}, {transform_indices = @transform_4, window_bounds = array<i64: 1, 64, 128>}]} {
    %c0 = arith.constant 0 : index
    %c0_0 = arith.constant 0 : index
    %c0_1 = arith.constant 0 : index
    %0 = vector.load %arg1[%c0, %c0_0, %c0_1] : memref<1x64x128xf32, #tpu.memory_space<vmem>>, vector<1x64x128xf32>
    %1 = vector.shape_cast %0 : vector<1x64x128xf32> to vector<64x128xf32>
    %c0_2 = arith.constant 0 : index
    %c0_3 = arith.constant 0 : index
    %2 = vector.load %arg2[%c0_2, %c0_3] : memref<128x256xf32, #tpu.memory_space<vmem>>, vector<128x256xf32>
    %cst = arith.constant dense<0.000000e+00> : vector<64x256xf32>
    %3 = tpu.matmul %1, %2, %cst {dimension_numbers = #tpu.dot_dimension_numbers<[1], [0], [0], [1], [0, 0, 1, 1], [], []>} : vector<64x128xf32>, vector<128x256xf32>, vector<64x256xf32> -> vector<64x256xf32>
    %4 = vector.shape_cast %3 : vector<64x256xf32> to vector<1x64x256xf32>
    %cst_4 = arith.constant dense<0.000000e+00> : vector<1x256xf32>
    %5 = vector.multi_reduction <add>, %4, %cst_4 [1] : vector<1x64x256xf32> to vector<1x256xf32>
    %6 = vector.shape_cast %5 : vector<1x256xf32> to vector<1x1x256xf32>
    %7 = arith.mulf %4, %4 : vector<1x64x256xf32>
    %cst_5 = arith.constant dense<0.000000e+00> : vector<1x256xf32>
    %8 = vector.multi_reduction <add>, %7, %cst_5 [1] : vector<1x64x256xf32> to vector<1x256xf32>
    %9 = vector.shape_cast %8 : vector<1x256xf32> to vector<1x1x256xf32>
    %cst_6 = arith.constant 1.562500e-02 : f32
    %10 = vector.broadcast %cst_6 : f32 to vector<1x1x256xf32>
    %11 = arith.mulf %6, %10 : vector<1x1x256xf32>
    %cst_7 = arith.constant 1.562500e-02 : f32
    %12 = vector.broadcast %cst_7 : f32 to vector<1x1x256xf32>
    %13 = arith.mulf %9, %12 : vector<1x1x256xf32>
    %14 = arith.mulf %11, %11 : vector<1x1x256xf32>
    %15 = arith.subf %13, %14 : vector<1x1x256xf32>
    %c0_8 = arith.constant 0 : index
    %c0_9 = arith.constant 0 : index
    %16 = vector.load %arg4[%c0_8, %c0_9] : memref<2x256xf32, #tpu.memory_space<vmem>>, vector<1x256xf32>
    %c1 = arith.constant 1 : index
    %c0_10 = arith.constant 0 : index
    %17 = vector.load %arg4[%c1, %c0_10] : memref<2x256xf32, #tpu.memory_space<vmem>>, vector<1x256xf32>
    %cst_11 = arith.constant 9.99999974E-6 : f32
    %18 = vector.broadcast %cst_11 : f32 to vector<1x1x256xf32>
    %19 = arith.addf %15, %18 : vector<1x1x256xf32>
    %20 = math.rsqrt %19 : vector<1x1x256xf32>
    %21 = vector.shape_cast %16 : vector<1x256xf32> to vector<1x1x256xf32>
    %22 = arith.mulf %21, %20 : vector<1x1x256xf32>
    %23 = vector.broadcast %11 : vector<1x1x256xf32> to vector<1x64x256xf32>
    %24 = arith.subf %4, %23 : vector<1x64x256xf32>
    %25 = vector.broadcast %22 : vector<1x1x256xf32> to vector<1x64x256xf32>
    %26 = arith.mulf %24, %25 : vector<1x64x256xf32>
    %27 = vector.shape_cast %17 : vector<1x256xf32> to vector<1x1x256xf32>
    %28 = vector.broadcast %27 : vector<1x1x256xf32> to vector<1x64x256xf32>
    %29 = arith.addf %26, %28 : vector<1x64x256xf32>
    %30 = arith.negf %29 : vector<1x64x256xf32>
    %31 = math.exp %30 : vector<1x64x256xf32>
    %cst_12 = arith.constant 1.000000e+00 : f32
    %32 = vector.broadcast %cst_12 : f32 to vector<1x64x256xf32>
    %33 = arith.addf %32, %31 : vector<1x64x256xf32>
    %34 = arith.divf %32, %33 : vector<1x64x256xf32>
    %35 = arith.mulf %4, %34 : vector<1x64x256xf32>
    %36 = vector.shape_cast %35 : vector<1x64x256xf32> to vector<64x256xf32>
    %c0_13 = arith.constant 0 : index
    %c0_14 = arith.constant 0 : index
    %37 = vector.load %arg3[%c0_13, %c0_14] : memref<256x128xf32, #tpu.memory_space<vmem>>, vector<256x128xf32>
    %cst_15 = arith.constant dense<0.000000e+00> : vector<64x128xf32>
    %38 = tpu.matmul %36, %37, %cst_15 {dimension_numbers = #tpu.dot_dimension_numbers<[1], [0], [0], [1], [0, 0, 1, 1], [], []>} : vector<64x256xf32>, vector<256x128xf32>, vector<64x128xf32> -> vector<64x128xf32>
    %39 = vector.shape_cast %38 : vector<64x128xf32> to vector<1x64x128xf32>
    %c0_16 = arith.constant 0 : index
    %c0_17 = arith.constant 0 : index
    %c0_18 = arith.constant 0 : index
    %40 = vector.load %arg5[%c0_16, %c0_17, %c0_18] : memref<1x64x128xf32, #tpu.memory_space<vmem>>, vector<1x64x128xf32>
    tpu.vector_store %arg5[%c0_16, %c0_17, %c0_18], %39 {strides = array<i32>} : memref<1x64x128xf32, #tpu.memory_space<vmem>>, vector<1x64x128xf32>,
    return
  }
  func.func @transform_0(%arg0: i32) -> (i32, i32, i32) {
    %c0_i32 = arith.constant 0 : i32
    %c0_i32_0 = arith.constant 0 : i32
    %c0_i32_1 = arith.constant 0 : i32
    return %arg0, %c0_i32, %c0_i32_0 : i32, i32, i32
  }
  func.func @transform_1(%arg0: i32) -> (i32, i32) {
    %c0_i32 = arith.constant 0 : i32
    %c0_i32_0 = arith.constant 0 : i32
    %c0_i32_1 = arith.constant 0 : i32
    return %c0_i32, %c0_i32_0 : i32, i32
  }
  func.func @transform_2(%arg0: i32) -> (i32, i32) {
    %c0_i32 = arith.constant 0 : i32
    %c0_i32_0 = arith.constant 0 : i32
    %c0_i32_1 = arith.constant 0 : i32
    return %c0_i32, %c0_i32_0 : i32, i32
  }
  func.func @transform_3(%arg0: i32) -> (i32, i32) {
    %c0_i32 = arith.constant 0 : i32
    %c0_i32_0 = arith.constant 0 : i32
    %c0_i32_1 = arith.constant 0 : i32
    return %c0_i32, %c0_i32_0 : i32, i32
  }
  func.func @transform_4(%arg0: i32) -> (i32, i32, i32) {
    %c0_i32 = arith.constant 0 : i32
    %c0_i32_0 = arith.constant 0 : i32
    %c0_i32_1 = arith.constant 0 : i32
    return %arg0, %c0_i32, %c0_i32_0 : i32, i32, i32
  }
}

</mosaic_0001>

<llo_original>
// kernel: tpu_custom_call.1
$region0: #{tpu_custom_call.1}
  #allocation0 [shape = 'u32[]', space=smem, size = 0x4, offset = 0x4, fixed_abs, tag = 'smem constant byte address 0x4 - core index']
  #allocation1 [shape = 'u32[72,128]{1,0:T(1,128)}', space=vmem, size = 0x9000, scoped, tag = 'internal scratch']
  %s0 = inlined_call_operand.hbm [shape: f32[2,64,128], index: 0, kind: input, shape index: {}]
  %s1 = inlined_call_operand.hbm [shape: f32[128,256], index: 1, kind: input, shape index: {}]
  %s2 = inlined_call_operand.hbm [shape: f32[256,128], index: 2, kind: input, shape index: {}]
  %s3 = inlined_call_operand.hbm [shape: f32[2,256], index: 3, kind: input, shape index: {}]
  %s4 = inlined_call_operand.hbm [shape: f32[2,64,128], index: 4, kind: output, shape index: {}]
  %s5 = sld [smem:[#allocation0]]
  $region65: #{tpu_custom_call.1} parent=0
    _
  %s7 = ssub.s32 1, %s5
  %s8 = scalar_select 0, %s7, %s5
  $region1: #{tpu_custom_call.1} parent=0
    #allocation2 [shape = 'u8[65536]{0}', space=vmem, size = 0x10000, scoped, tag = 'input window, operand 0']
    #allocation3 [shape = 's32[2]{0}', space=sflag, size = 0x8, scoped, tag = 'scoped memory for tpu_custom_call.1']
    #allocation4 [shape = 's32[2]{0}', space=sflag, size = 0x8, scoped, tag = 'scoped memory for tpu_custom_call.1']
    #allocation5 [shape = 'u8[131072]{0}', space=vmem, size = 0x20000, scoped, tag = 'input window, operand 1, single buffered']
    #allocation6 [shape = 's32[1]{0}', space=sflag, size = 0x4, scoped, tag = 'scoped memory for tpu_custom_call.1']
    #allocation7 [shape = 'u8[131072]{0}', space=vmem, size = 0x20000, scoped, tag = 'input window, operand 2, single buffered']
    #allocation8 [shape = 'u8[2048]{0}', space=vmem, size = 0x800, scoped, tag = 'input window, operand 3, single buffered']
    #allocation9 [shape = 's32[1]{0}', space=sflag, size = 0x4, scoped, tag = 'scoped memory for tpu_custom_call.1']
    #allocation10 [shape = 'u8[65536]{0}', space=vmem, size = 0x10000, scoped, tag = 'output window, operand 0']
    %9 = vsyncpa [#allocation3], 0
    %s10 = scalar_lea.sflag [#allocation3], 1
    %11 = vsyncpa %s10, 0
    %12 = vsyncpa [#allocation6], 0
    %13 = vsyncpa [#allocation9], 0
    %14 = vsyncpa [#allocation4], 0
    %s15 = scalar_lea.sflag [#allocation4], 1
    %16 = vsyncpa %s15, 0
    loop: start=0, step=1, limit=4
    $region2: #{tpu_custom_call.1} parent=1 // loop_pre_header
      _
    $region3: #{tpu_custom_call.1} parent=1 // loop_header
      %s18 = sphi 0, %s22
      %p19 = scmp.ge.s32.totalorder %s18, 4
      %s28 = sphi 0, %s30
      %s31 = sphi 0, %s28
      %s32 = sphi 0, %s31
      %s48 = sphi 0, %s32
      %s52 = sphi 0, %s52
      %s54 = sphi 0, %s52
      %s55 = sphi 0, %s54
      %s69 = sphi 0, %s55
      %s73 = sphi 0, %s73
      %s75 = sphi 0, %s73
      %s76 = sphi 0, %s75
      %s90 = sphi 0, %s76
      %s94 = sphi 0, %s94
      %s96 = sphi 0, %s94
      %s97 = sphi 0, %s96
      %s111 = sphi 0, %s97
      %s117 = sphi 0, %s119
      %s120 = sphi 0, %s117
      %s121 = sphi 0, %s120
      %s137 = sphi 0, %s121
    $region4: #{tpu_custom_call.1} parent=1 // loop_header_branch
      %21 = sbr.rel (%p19) target = $region8
    $region5: #{tpu_custom_call.1} parent=1 // loop_body
      %s23 = ssub.s32 %s18, 1
      %s24 = ssub.s32 %s18, 2
      %s25 = sadd.s32 %s18, 1
      %s26 = ssub.s32 %s18, %s25
      %p27 = scmp.eq.s32.totalorder %s26, 0
      %s29 = sadd.s32 %s28, 1
      %s30 = scalar_select %p27, %s28, %s29
      %p33 = pneg %p27
      %p34 = scmp.eq.s32.totalorder %s18, 1
      %p35 = por %p33, %p34
      %p36 = scmp.ne.s32.totalorder %s28, %s31
      %p37 = scmp.eq.s32.totalorder %s18, 0
      %p38 = por %p36, %p37
      %p39 = scmp.ne.s32.totalorder %s28, %s31
      %p40 = scmp.eq.s32.totalorder %s23, 1
      %p41 = por %p39, %p40
      %p42 = scmp.ne.s32.totalorder %s31, %s32
      %p43 = scmp.eq.s32.totalorder %s23, 0
      %p44 = por %p42, %p43
      %p45 = scmp.ne.s32.totalorder %s31, %s32
      %p46 = scmp.eq.s32.totalorder %s24, 1
      %p47 = por %p45, %p46
      %p49 = scmp.ne.s32.totalorder %s32, %s48
      %p50 = scmp.eq.s32.totalorder %s24, 0
      %p51 = por %p49, %p50
      %s53 = sadd.s32 %s52, 1
      %p56 = scmp.eq.s32.totalorder %s18, 1
      %p57 = scmp.ne.s32.totalorder %s52, %s54
      %p58 = scmp.eq.s32.totalorder %s18, 0
      %p59 = por %p57, %p58
      %p60 = scmp.ne.s32.totalorder %s52, %s54
      %p61 = scmp.eq.s32.totalorder %s23, 1
      %p62 = por %p60, %p61
      %p63 = scmp.ne.s32.totalorder %s54, %s55
      %p64 = scmp.eq.s32.totalorder %s23, 0
      %p65 = por %p63, %p64
      %p66 = scmp.ne.s32.totalorder %s54, %s55
      %p67 = scmp.eq.s32.totalorder %s24, 1
      %p68 = por %p66, %p67
      %p70 = scmp.ne.s32.totalorder %s55, %s69
      %p71 = scmp.eq.s32.totalorder %s24, 0
      %p72 = por %p70, %p71
      %s74 = sadd.s32 %s73, 1
      %p77 = scmp.eq.s32.totalorder %s18, 1
      %p78 = scmp.ne.s32.totalorder %s73, %s75
      %p79 = scmp.eq.s32.totalorder %s18, 0
      %p80 = por %p78, %p79
      %p81 = scmp.ne.s32.totalorder %s73, %s75
      %p82 = scmp.eq.s32.totalorder %s23, 1
      %p83 = por %p81, %p82
      %p84 = scmp.ne.s32.totalorder %s75, %s76
      %p85 = scmp.eq.s32.totalorder %s23, 0
      %p86 = por %p84, %p85
      %p87 = scmp.ne.s32.totalorder %s75, %s76
      %p88 = scmp.eq.s32.totalorder %s24, 1
      %p89 = por %p87, %p88
      %p91 = scmp.ne.s32.totalorder %s76, %s90
      %p92 = scmp.eq.s32.totalorder %s24, 0
      %p93 = por %p91, %p92
      %s95 = sadd.s32 %s94, 1
      %p98 = scmp.eq.s32.totalorder %s18, 1
      %p99 = scmp.ne.s32.totalorder %s94, %s96
      %p100 = scmp.eq.s32.totalorder %s18, 0
      %p101 = por %p99, %p100
      %p102 = scmp.ne.s32.totalorder %s94, %s96
      %p103 = scmp.eq.s32.totalorder %s23, 1
      %p104 = por %p102, %p103
      %p105 = scmp.ne.s32.totalorder %s96, %s97
      %p106 = scmp.eq.s32.totalorder %s23, 0
      %p107 = por %p105, %p106
      %p108 = scmp.ne.s32.totalorder %s96, %s97
      %p109 = scmp.eq.s32.totalorder %s24, 1
      %p110 = por %p108, %p109
      %p112 = scmp.ne.s32.totalorder %s97, %s111
      %p113 = scmp.eq.s32.totalorder %s24, 0
      %p114 = por %p112, %p113
      %s115 = ssub.s32 %s18, %s25
      %p116 = scmp.eq.s32.totalorder %s115, 0
      %s118 = sadd.s32 %s117, 1
      %s119 = scalar_select %p116, %s117, %s118
      %p122 = pneg %p116
      %p123 = scmp.eq.s32.totalorder %s18, 1
      %p124 = por %p122, %p123
      %p125 = scmp.ne.s32.totalorder %s117, %s120
      %p126 = scmp.eq.s32.totalorder %s18, 0
      %p127 = por %p125, %p126
      %p128 = scmp.ne.s32.totalorder %s117, %s120
      %p129 = scmp.eq.s32.totalorder %s23, 1
      %p130 = por %p128, %p129
      %p131 = scmp.ne.s32.totalorder %s120, %s121
      %p132 = scmp.eq.s32.totalorder %s23, 0
      %p133 = por %p131, %p132
      %p134 = scmp.ne.s32.totalorder %s120, %s121
      %p135 = scmp.eq.s32.totalorder %s24, 1
      %p136 = por %p134, %p135
      %p138 = scmp.ne.s32.totalorder %s121, %s137
      %p139 = scmp.eq.s32.totalorder %s24, 0
      %p140 = por %p138, %p139
      %p141 = scmp.le.s32.totalorder 1, %s18
      %p142 = scmp.lt.s32.totalorder %s18, 3
      %p143 = pnand %p141, %p142
      %p144 = pneg %p143
      // Predicated region
      $region9: #{tpu_custom_call.1} parent=5 // pred_check
        _
      $region10: #{tpu_custom_call.1} parent=5 // pred_check_branch
        %146 = sbr.rel (%p143) target = $region12
      $region11: #{tpu_custom_call.1} parent=5 // pred_region
        %s147 = ssub.s32 %s18, 1
        // Predicated region
        $region13: #{tpu_custom_call.1} parent=11 // pred_check
          %p148 = pneg %p65
        $region14: #{tpu_custom_call.1} parent=11 // pred_check_branch
          %150 = sbr.rel (%p148) target = $region16
        $region15: #{tpu_custom_call.1} parent=11 // pred_region
          %152 = vsyncadd [#allocation6], 0
          %s153 = sshll.u32 %s1, 4
          %s154 = int_to_ptr.hbm [resolvable:$true] %s153
          %s155 = sshll.u32 [#allocation5], 4
          %s156 = int_to_ptr.vmem [resolvable:$true] %s155
          %161 = dma.hbm_to_vmem [thread:$0]  %s154, 4096, %s156, [#allocation6], 256, 256, 16
        $region16: #{tpu_custom_call.1} parent=11 // pred_fallthru
          _
        // Predicated region
        $region17: #{tpu_custom_call.1} parent=11 // pred_check
          %p162 = pneg %p86
        $region18: #{tpu_custom_call.1} parent=11 // pred_check_branch
          %164 = sbr.rel (%p162) target = $region20
        $region19: #{tpu_custom_call.1} parent=11 // pred_region
          %166 = vsyncadd [#allocation6], 0
          %s167 = sshll.u32 %s2, 4
          %s168 = int_to_ptr.hbm [resolvable:$true] %s167
          %s169 = sshll.u32 [#allocation7], 4
          %s170 = int_to_ptr.vmem [resolvable:$true] %s169
          %175 = dma.hbm_to_vmem [thread:$0]  %s168, 4096, %s170, [#allocation6], 128, 128, 8
        $region20: #{tpu_custom_call.1} parent=11 // pred_fallthru
          _
        // Predicated region
        $region21: #{tpu_custom_call.1} parent=11 // pred_check
          %p176 = pneg %p107
        $region22: #{tpu_custom_call.1} parent=11 // pred_check_branch
          %178 = sbr.rel (%p176) target = $region24
        $region23: #{tpu_custom_call.1} parent=11 // pred_region
          %180 = vsyncadd [#allocation9], 0
          %s182 = sshll.u32 %s3, 4
          %s183 = int_to_ptr.hbm [resolvable:$true] %s182
          %s184 = sshll.u32 [#allocation8], 4
          %s185 = int_to_ptr.vmem [resolvable:$true] %s184
          %187 = dma.hbm_to_vmem [thread:$0]  %s183, 64, %s185, [#allocation9]
        $region24: #{tpu_custom_call.1} parent=11 // pred_fallthru
          _
      $region12: #{tpu_custom_call.1} parent=5 // pred_fallthru
        _
      %p188 = scmp.lt.s32.totalorder %s18, 2
      // Predicated region
      $region25: #{tpu_custom_call.1} parent=5 // pred_check
        %p189 = pneg %p188
      $region26: #{tpu_custom_call.1} parent=5 // pred_check_branch
        %191 = sbr.rel (%p189) target = $region28
      $region27: #{tpu_custom_call.1} parent=5 // pred_region
        // Predicated region
        $region29: #{tpu_custom_call.1} parent=27 // pred_check
          %p192 = pneg %p38
        $region30: #{tpu_custom_call.1} parent=27 // pred_check_branch
          %194 = sbr.rel (%p192) target = $region32
        $region31: #{tpu_custom_call.1} parent=27 // pred_region
          %s195 = sand.u32 %s28, 1
          %s196 = scalar_lea.sflag [#allocation3], %s195
          %s197 = sand.u32 %s28, 1
          %s198 = smul.addr %s197, 64
          %s199 = scalar_lea.vmem [#allocation2], %s198
          %201 = vsyncadd %s196, 0
          %s202 = smul.addr %s18, 8
          %s203 = smul.addr %s202, 8
          %s204 = scalar_lea.hbm %s0, %s203
          %s205 = sshll.u32 %s204, 4
          %s206 = int_to_ptr.hbm [resolvable:$true] %s205
          %s207 = sshll.u32 %s199, 4
          %s208 = int_to_ptr.vmem [resolvable:$true] %s207
          %213 = dma.hbm_to_vmem [thread:$0]  %s206, 1024, %s208, %s196, 128, 128, 8
        $region32: #{tpu_custom_call.1} parent=27 // pred_fallthru
          _
      $region28: #{tpu_custom_call.1} parent=5 // pred_fallthru
        _
      %p214 = scmp.le.s32.totalorder 1, %s18
      %p215 = scmp.lt.s32.totalorder %s18, 3
      %p216 = pnand %p214, %p215
      %p217 = pneg %p216
      // Predicated region
      $region33: #{tpu_custom_call.1} parent=5 // pred_check
        _
      $region34: #{tpu_custom_call.1} parent=5 // pred_check_branch
        %219 = sbr.rel (%p216) target = $region36
      $region35: #{tpu_custom_call.1} parent=5 // pred_region
        %s220 = ssub.s32 %s18, 1
        %s221 = sand.u32 %s31, 1
        %s222 = scalar_lea.sflag [#allocation3], %s221
        %s223 = sand.u32 %s31, 1
        %s224 = smul.addr %s223, 64
        %s225 = scalar_lea.vmem [#allocation2], %s224
        // Predicated region
        $region37: #{tpu_custom_call.1} parent=35 // pred_check
          %p226 = pneg %p44
        $region38: #{tpu_custom_call.1} parent=35 // pred_check_branch
          %228 = sbr.rel (%p226) target = $region40
        $region39: #{tpu_custom_call.1} parent=35 // pred_region
          %230 = dma.done %s222, 1024
        $region40: #{tpu_custom_call.1} parent=35 // pred_fallthru
          _
        // Predicated region
        $region41: #{tpu_custom_call.1} parent=35 // pred_check
          %p231 = pneg %p65
        $region42: #{tpu_custom_call.1} parent=35 // pred_check_branch
          %233 = sbr.rel (%p231) target = $region44
        $region43: #{tpu_custom_call.1} parent=35 // pred_region
          %235 = dma.done [#allocation6], 4096
        $region44: #{tpu_custom_call.1} parent=35 // pred_fallthru
          _
        // Predicated region
        $region45: #{tpu_custom_call.1} parent=35 // pred_check
          %p236 = pneg %p86
        $region46: #{tpu_custom_call.1} parent=35 // pred_check_branch
          %238 = sbr.rel (%p236) target = $region48
        $region47: #{tpu_custom_call.1} parent=35 // pred_region
          %240 = dma.done [#allocation6], 4096
        $region48: #{tpu_custom_call.1} parent=35 // pred_fallthru
          _
        // Predicated region
        $region49: #{tpu_custom_call.1} parent=35 // pred_check
          %p241 = pneg %p107
        $region50: #{tpu_custom_call.1} parent=35 // pred_check_branch
          %243 = sbr.rel (%p241) target = $region52
        $region51: #{tpu_custom_call.1} parent=35 // pred_region
          %245 = dma.done [#allocation9], 64
        $region52: #{tpu_custom_call.1} parent=35 // pred_fallthru
          _
        %s246 = sand.u32 %s31, 1
        %s247 = scalar_lea.sflag [#allocation3], %s246
        %s248 = sand.u32 %s31, 1
        %s249 = smul.addr %s248, 64
        %s250 = scalar_lea.vmem [#allocation2], %s249
        %p251 = pneg %p44
        %p252 = pneg %p41
        %p253 = pneg %p65
        %p254 = pneg %p62
        %p255 = pneg %p86
        %p256 = pneg %p83
        %p257 = pneg %p107
        %p258 = pneg %p104
        %p259 = pneg %p133
        %p260 = pneg %p130
        %s261 = sand.u32 %s120, 1
        %s262 = scalar_lea.sflag [#allocation4], %s261
        %s263 = sand.u32 %s120, 1
        %s264 = smul.addr %s263, 64
        %s265 = scalar_lea.vmem [#allocation10], %s264
        %v266 = vld [vmem:[%s225] sm:$0xff]
        %v267 = vld [vmem:[%s225 + $0x8] sm:$0xff]
        %v268 = vld [vmem:[%s225 + $0x10] sm:$0xff]
        %v269 = vld [vmem:[%s225 + $0x18] sm:$0xff]
        %v270 = vld [vmem:[%s225 + $0x20] sm:$0xff]
        %v271 = vld [vmem:[%s225 + $0x28] sm:$0xff]
        %v272 = vld [vmem:[%s225 + $0x30] sm:$0xff]
        %v273 = vld [vmem:[%s225 + $0x38] sm:$0xff]
        %v274 = vld [vmem:[#allocation5] sm:$0xff]
        %v275 = vld [vmem:[#allocation5 + $0x8] sm:$0xff]
        %v276 = vld [vmem:[#allocation5 + $0x10] sm:$0xff]
        %v277 = vld [vmem:[#allocation5 + $0x18] sm:$0xff]
        %v278 = vld [vmem:[#allocation5 + $0x20] sm:$0xff]
        %v279 = vld [vmem:[#allocation5 + $0x28] sm:$0xff]
        %v280 = vld [vmem:[#allocation5 + $0x30] sm:$0xff]
        %v281 = vld [vmem:[#allocation5 + $0x38] sm:$0xff]
        %v282 = vld [vmem:[#allocation5 + $0x40] sm:$0xff]
        %v283 = vld [vmem:[#allocation5 + $0x48] sm:$0xff]
        %v284 = vld [vmem:[#allocation5 + $0x50] sm:$0xff]
        %v285 = vld [vmem:[#allocation5 + $0x58] sm:$0xff]
        %v286 = vld [vmem:[#allocation5 + $0x60] sm:$0xff]
        %v287 = vld [vmem:[#allocation5 + $0x68] sm:$0xff]
        %v288 = vld [vmem:[#allocation5 + $0x70] sm:$0xff]
        %v289 = vld [vmem:[#allocation5 + $0x78] sm:$0xff]
        %v290 = vld [vmem:[#allocation5 + $0x80] sm:$0xff]
        %v291 = vld [vmem:[#allocation5 + $0x88] sm:$0xff]
        %v292 = vld [vmem:[#allocation5 + $0x90] sm:$0xff]
        %v293 = vld [vmem:[#allocation5 + $0x98] sm:$0xff]
        %v294 = vld [vmem:[#allocation5 + $0xa0] sm:$0xff]
        %v295 = vld [vmem:[#allocation5 + $0xa8] sm:$0xff]
        %v296 = vld [vmem:[#allocation5 + $0xb0] sm:$0xff]
        %v297 = vld [vmem:[#allocation5 + $0xb8] sm:$0xff]
        %v298 = vld [vmem:[#allocation5 + $0xc0] sm:$0xff]
        %v299 = vld [vmem:[#allocation5 + $0xc8] sm:$0xff]
        %v300 = vld [vmem:[#allocation5 + $0xd0] sm:$0xff]
        %v301 = vld [vmem:[#allocation5 + $0xd8] sm:$0xff]
        %v302 = vld [vmem:[#allocation5 + $0xe0] sm:$0xff]
        %v303 = vld [vmem:[#allocation5 + $0xe8] sm:$0xff]
        %v304 = vld [vmem:[#allocation5 + $0xf0] sm:$0xff]
        %v305 = vld [vmem:[#allocation5 + $0xf8] sm:$0xff]
        %306 = vmatpush.msra.mxu0 %v304
        %307 = vmatpush.msra.mxu0 %v302
        %308 = vmatpush.msra.mxu0 %v300
        %309 = vmatpush.msra.mxu0 %v298
        %310 = vmatpush.msra.mxu0 %v296
        %311 = vmatpush.msra.mxu0 %v294
        %312 = vmatpush.msra.mxu0 %v292
        %313 = vmatpush.msra.mxu0 %v290
        %314 = vmatpush.msra.mxu0 %v288
        %315 = vmatpush.msra.mxu0 %v286
        %316 = vmatpush.msra.mxu0 %v284
        %317 = vmatpush.msra.mxu0 %v282
        %318 = vmatpush.msra.mxu0 %v280
        %319 = vmatpush.msra.mxu0 %v278
        %320 = vmatpush.msra.mxu0 %v276
        %321 = vmatpush.msra.mxu0 %v274
        %322 = vmatmul.f32.gmra.mxu0 %v266
        %v323 = vpop.f32.mrf.mxu0
        %v324 = vadd.f32 0.0, %v323
        %325 = vmatmul.f32.gmra.mxu0 %v267
        %v326 = vpop.f32.mrf.mxu0
        %v327 = vadd.f32 0.0, %v326
        %328 = vmatmul.f32.gmra.mxu0 %v268
        %v329 = vpop.f32.mrf.mxu0
        %v330 = vadd.f32 0.0, %v329
        %331 = vmatmul.f32.gmra.mxu0 %v269
        %v332 = vpop.f32.mrf.mxu0
        %v333 = vadd.f32 0.0, %v332
        %334 = vmatmul.f32.gmra.mxu0 %v270
        %v335 = vpop.f32.mrf.mxu0
        %v336 = vadd.f32 0.0, %v335
        %337 = vmatmul.f32.gmra.mxu0 %v271
        %v338 = vpop.f32.mrf.mxu0
        %v339 = vadd.f32 0.0, %v338
        %340 = vmatmul.f32.gmra.mxu0 %v272
        %v341 = vpop.f32.mrf.mxu0
        %v342 = vadd.f32 0.0, %v341
        %343 = vmatmul.f32.gmra.mxu0 %v273
        %v344 = vpop.f32.mrf.mxu0
        %v345 = vadd.f32 0.0, %v344
        %346 = vdwg.mxu0
        %347 = vmatpush.msra.mxu0 %v305
        %348 = vmatpush.msra.mxu0 %v303
        %349 = vmatpush.msra.mxu0 %v301
        %350 = vmatpush.msra.mxu0 %v299
        %351 = vmatpush.msra.mxu0 %v297
        %352 = vmatpush.msra.mxu0 %v295
        %353 = vmatpush.msra.mxu0 %v293
        %354 = vmatpush.msra.mxu0 %v291
        %355 = vmatpush.msra.mxu0 %v289
        %356 = vmatpush.msra.mxu0 %v287
        %357 = vmatpush.msra.mxu0 %v285
        %358 = vmatpush.msra.mxu0 %v283
        %359 = vmatpush.msra.mxu0 %v281
        %360 = vmatpush.msra.mxu0 %v279
        %361 = vmatpush.msra.mxu0 %v277
        %362 = vmatpush.msra.mxu0 %v275
        %363 = vmatmul.f32.gmra.mxu0 %v266
        %v364 = vpop.f32.mrf.mxu0
        %v365 = vadd.f32 0.0, %v364
        %366 = vmatmul.f32.gmra.mxu0 %v267
        %v367 = vpop.f32.mrf.mxu0
        %v368 = vadd.f32 0.0, %v367
        %369 = vmatmul.f32.gmra.mxu0 %v268
        %v370 = vpop.f32.mrf.mxu0
        %v371 = vadd.f32 0.0, %v370
        %372 = vmatmul.f32.gmra.mxu0 %v269
        %v373 = vpop.f32.mrf.mxu0
        %v374 = vadd.f32 0.0, %v373
        %375 = vmatmul.f32.gmra.mxu0 %v270
        %v376 = vpop.f32.mrf.mxu0
        %v377 = vadd.f32 0.0, %v376
        %378 = vmatmul.f32.gmra.mxu0 %v271
        %v379 = vpop.f32.mrf.mxu0
        %v380 = vadd.f32 0.0, %v379
        %381 = vmatmul.f32.gmra.mxu0 %v272
        %v382 = vpop.f32.mrf.mxu0
        %v383 = vadd.f32 0.0, %v382
        %384 = vmatmul.f32.gmra.mxu0 %v273
        %v385 = vpop.f32.mrf.mxu0
        %v386 = vadd.f32 0.0, %v385
        %387 = vdwg.mxu0
        %v388 = vadd.f32 %v324, %v327
        %v389 = vadd.f32 %v388, %v330
        %v390 = vadd.f32 %v389, %v333
        %v391 = vadd.f32 %v390, %v336
        %v392 = vadd.f32 %v391, %v339
        %v393 = vadd.f32 %v392, %v342
        %v394 = vadd.f32 %v393, %v345
        %v395 = vrot.slane %v394, 4
        %v396 = vadd.f32 %v394, %v395
        %v397 = vrot.slane %v396, 2
        %v398 = vadd.f32 %v396, %v397
        %v399 = vrot.slane %v398, 1
        %v400 = vadd.f32 %v398, %v399
        %v401 = vadd.f32 %v365, %v368
        %v402 = vadd.f32 %v401, %v371
        %v403 = vadd.f32 %v402, %v374
        %v404 = vadd.f32 %v403, %v377
        %v405 = vadd.f32 %v404, %v380
        %v406 = vadd.f32 %v405, %v383
        %v407 = vadd.f32 %v406, %v386
        %v408 = vrot.slane %v407, 4
        %v409 = vadd.f32 %v407, %v408
        %v410 = vrot.slane %v409, 2
        %v411 = vadd.f32 %v409, %v410
        %v412 = vrot.slane %v411, 1
        %v413 = vadd.f32 %v411, %v412
        %v414 = vmul.f32 %v324, %v324
        %v415 = vmul.f32 %v365, %v365
        %v416 = vmul.f32 %v327, %v327
        %v417 = vmul.f32 %v368, %v368
        %v418 = vmul.f32 %v330, %v330
        %v419 = vmul.f32 %v371, %v371
        %v420 = vmul.f32 %v333, %v333
        %v421 = vmul.f32 %v374, %v374
        %v422 = vmul.f32 %v336, %v336
        %v423 = vmul.f32 %v377, %v377
        %v424 = vmul.f32 %v339, %v339
        %v425 = vmul.f32 %v380, %v380
        %v426 = vmul.f32 %v342, %v342
        %v427 = vmul.f32 %v383, %v383
        %v428 = vmul.f32 %v345, %v345
        %v429 = vmul.f32 %v386, %v386
        %v430 = vadd.f32 %v414, %v416
        %v431 = vadd.f32 %v430, %v418
        %v432 = vadd.f32 %v431, %v420
        %v433 = vadd.f32 %v432, %v422
        %v434 = vadd.f32 %v433, %v424
        %v435 = vadd.f32 %v434, %v426
        %v436 = vadd.f32 %v435, %v428
        %v437 = vrot.slane %v436, 4
        %v438 = vadd.f32 %v436, %v437
        %v439 = vrot.slane %v438, 2
        %v440 = vadd.f32 %v438, %v439
        %v441 = vrot.slane %v440, 1
        %v442 = vadd.f32 %v440, %v441
        %v443 = vadd.f32 %v415, %v417
        %v444 = vadd.f32 %v443, %v419
        %v445 = vadd.f32 %v444, %v421
        %v446 = vadd.f32 %v445, %v423
        %v447 = vadd.f32 %v446, %v425
        %v448 = vadd.f32 %v447, %v427
        %v449 = vadd.f32 %v448, %v429
        %v450 = vrot.slane %v449, 4
        %v451 = vadd.f32 %v449, %v450
        %v452 = vrot.slane %v451, 2
        %v453 = vadd.f32 %v451, %v452
        %v454 = vrot.slane %v453, 1
        %v455 = vadd.f32 %v453, %v454
        %v456 = vmul.f32 %v400, 0.015625
        %v457 = vmul.f32 %v413, 0.015625
        %v458 = vmul.f32 %v442, 0.015625
        %v459 = vmul.f32 %v455, 0.015625
        %v460 = vmul.f32 %v456, %v456
        %v461 = vmul.f32 %v457, %v457
        %v462 = vsub.f32 %v458, %v460
        %v463 = vsub.f32 %v459, %v461
        %v464 = vld [vmem:[#allocation8] ss:$2 sm:$0x3]
        %s465 = scalar_lea.vmem [#allocation8], 1
        %v466 = vld [vmem:[%s465] ss:$2 sm:$0x3]
        %v467 = vadd.f32 %v462, 1e-05
        %v468 = vadd.f32 %v463, 1e-05
        %v469 = vrsqrt.pop %v467
        %v470 = vmul.f32 %v469, %v467
        %v471 = vmul.f32 %v470, %v469
        %v472 = vmul.f32 0.5, %v471
        %v473 = vsub.f32 1.5, %v472
        %v474 = vmul.f32 %v469, %v473
        %vm475 = vweird.f32 %v467
        %vm476 = vweird.f32 %v469
        %vm477 = vmor %vm475, %vm476
        %v478 = vsel %vm477, %v469, %v474
        %v479 = vrsqrt.pop %v468
        %v480 = vmul.f32 %v479, %v468
        %v481 = vmul.f32 %v480, %v479
        %v482 = vmul.f32 0.5, %v481
        %v483 = vsub.f32 1.5, %v482
        %v484 = vmul.f32 %v479, %v483
        %vm485 = vweird.f32 %v468
        %vm486 = vweird.f32 %v479
        %vm487 = vmor %vm485, %vm486
        %v488 = vsel %vm487, %v479, %v484
        %v491 = vrot.slane %v488, 7
        %vm492 = vcmask 1040384
        %v493 = vsel %vm492, %v478, %v491
        %v495 = vmul.f32 %v464, %v493
        %v496 = vsub.f32 %v324, %v456
        %v497 = vsub.f32 %v365, %v457
        %v498 = vsub.f32 %v327, %v456
        %v499 = vsub.f32 %v368, %v457
        %v500 = vsub.f32 %v330, %v456
        %v501 = vsub.f32 %v371, %v457
        %v502 = vsub.f32 %v333, %v456
        %v503 = vsub.f32 %v374, %v457
        %v504 = vsub.f32 %v336, %v456
        %v505 = vsub.f32 %v377, %v457
        %v506 = vsub.f32 %v339, %v456
        %v507 = vsub.f32 %v380, %v457
        %v508 = vsub.f32 %v342, %v456
        %v509 = vsub.f32 %v383, %v457
        %v510 = vsub.f32 %v345, %v456
        %v511 = vsub.f32 %v386, %v457
        %v513 = vperm.slane %v495, 0
        %v514 = vperm.slane %v495, 1
        %v517 = vmul.f32 %v496, %v513
        %v518 = vmul.f32 %v497, %v514
        %v519 = vmul.f32 %v498, %v513
        %v520 = vmul.f32 %v499, %v514
        %v521 = vmul.f32 %v500, %v513
        %v522 = vmul.f32 %v501, %v514
        %v523 = vmul.f32 %v502, %v513
        %v524 = vmul.f32 %v503, %v514
        %v525 = vmul.f32 %v504, %v513
        %v526 = vmul.f32 %v505, %v514
        %v527 = vmul.f32 %v506, %v513
        %v528 = vmul.f32 %v507, %v514
        %v529 = vmul.f32 %v508, %v513
        %v530 = vmul.f32 %v509, %v514
        %v531 = vmul.f32 %v510, %v513
        %v532 = vmul.f32 %v511, %v514
        %v534 = vperm.slane %v466, 0
        %v535 = vperm.slane %v466, 1
        %v538 = vadd.f32 %v517, %v534
        %v539 = vadd.f32 %v518, %v535
        %v540 = vadd.f32 %v519, %v534
        %v541 = vadd.f32 %v520, %v535
        %v542 = vadd.f32 %v521, %v534
        %v543 = vadd.f32 %v522, %v535
        %v544 = vadd.f32 %v523, %v534
        %v545 = vadd.f32 %v524, %v535
        %v546 = vadd.f32 %v525, %v534
        %v547 = vadd.f32 %v526, %v535
        %v548 = vadd.f32 %v527, %v534
        %v549 = vadd.f32 %v528, %v535
        %v550 = vadd.f32 %v529, %v534
        %v551 = vadd.f32 %v530, %v535
        %v552 = vadd.f32 %v531, %v534
        %v553 = vadd.f32 %v532, %v535
        %v554 = vxor.u32 %v538, 2147483648
        %v555 = vxor.u32 %v539, 2147483648
        %v556 = vxor.u32 %v540, 2147483648
        %v557 = vxor.u32 %v541, 2147483648
        %v558 = vxor.u32 %v542, 2147483648
        %v559 = vxor.u32 %v543, 2147483648
        %v560 = vxor.u32 %v544, 2147483648
        %v561 = vxor.u32 %v545, 2147483648
        %v562 = vxor.u32 %v546, 2147483648
        %v563 = vxor.u32 %v547, 2147483648
        %v564 = vxor.u32 %v548, 2147483648
        %v565 = vxor.u32 %v549, 2147483648
        %v566 = vxor.u32 %v550, 2147483648
        %v567 = vxor.u32 %v551, 2147483648
        %v568 = vxor.u32 %v552, 2147483648
        %v569 = vxor.u32 %v553, 2147483648
        %v570 = vmul.f32 %v554, 1.442695
        %v571 = vpow.pop %v570
        %v572 = vmul.f32 %v555, 1.442695
        %v573 = vpow.pop %v572
        %v574 = vmul.f32 %v556, 1.442695
        %v575 = vpow.pop %v574
        %v576 = vmul.f32 %v557, 1.442695
        %v577 = vpow.pop %v576
        %v578 = vmul.f32 %v558, 1.442695
        %v579 = vpow.pop %v578
        %v580 = vmul.f32 %v559, 1.442695
        %v581 = vpow.pop %v580
        %v582 = vmul.f32 %v560, 1.442695
        %v583 = vpow.pop %v582
        %v584 = vmul.f32 %v561, 1.442695
        %v585 = vpow.pop %v584
        %v586 = vmul.f32 %v562, 1.442695
        %v587 = vpow.pop %v586
        %v588 = vmul.f32 %v563, 1.442695
        %v589 = vpow.pop %v588
        %v590 = vmul.f32 %v564, 1.442695
        %v591 = vpow.pop %v590
        %v592 = vmul.f32 %v565, 1.442695
        %v593 = vpow.pop %v592
        %v594 = vmul.f32 %v566, 1.442695
        %v595 = vpow.pop %v594
        %v596 = vmul.f32 %v567, 1.442695
        %v597 = vpow.pop %v596
        %v598 = vmul.f32 %v568, 1.442695
        %v599 = vpow.pop %v598
        %v600 = vmul.f32 %v569, 1.442695
        %v601 = vpow.pop %v600
        %v602 = vadd.f32 %v571, 1.0
        %v603 = vadd.f32 %v573, 1.0
        %v604 = vadd.f32 %v575, 1.0
        %v605 = vadd.f32 %v577, 1.0
        %v606 = vadd.f32 %v579, 1.0
        %v607 = vadd.f32 %v581, 1.0
        %v608 = vadd.f32 %v583, 1.0
        %v609 = vadd.f32 %v585, 1.0
        %v610 = vadd.f32 %v587, 1.0
        %v611 = vadd.f32 %v589, 1.0
        %v612 = vadd.f32 %v591, 1.0
        %v613 = vadd.f32 %v593, 1.0
        %v614 = vadd.f32 %v595, 1.0
        %v615 = vadd.f32 %v597, 1.0
        %v616 = vadd.f32 %v599, 1.0
        %v617 = vadd.f32 %v601, 1.0
        %v618 = vrcp.pop %v602
        %v619 = vmul.f32 %v602, %v618
        %v620 = vsub.f32 1.0, %v619
        %v621 = vmul.f32 %v618, %v620
        %v622 = vadd.f32 %v618, %v621
        %vm623 = vweird.f32 %v602
        %vm624 = vweird.f32 %v618
        %vm625 = vmor %vm623, %vm624
        %v626 = vsel %vm625, %v618, %v622
        %v627 = vand.u32 2147483647, %v602
        %vm628 = vcmp.eq.f32.partialorder %v627, 8.507059e+37
        %v629 = vand.u32 %v602, 2147483648
        %v630 = vor.u32 1.1754944e-38, %v629
        %v631 = vsel %vm628, %v630, %v626
        %v632 = vmul.f32 1.0, %v631
        %v633 = vrcp.pop %v603
        %v634 = vmul.f32 %v603, %v633
        %v635 = vsub.f32 1.0, %v634
        %v636 = vmul.f32 %v633, %v635
        %v637 = vadd.f32 %v633, %v636
        %vm638 = vweird.f32 %v603
        %vm639 = vweird.f32 %v633
        %vm640 = vmor %vm638, %vm639
        %v641 = vsel %vm640, %v633, %v637
        %v642 = vand.u32 2147483647, %v603
        %vm643 = vcmp.eq.f32.partialorder %v642, 8.507059e+37
        %v644 = vand.u32 %v603, 2147483648
        %v645 = vor.u32 1.1754944e-38, %v644
        %v646 = vsel %vm643, %v645, %v641
        %v647 = vmul.f32 1.0, %v646
        %v648 = vrcp.pop %v604
        %v649 = vmul.f32 %v604, %v648
        %v650 = vsub.f32 1.0, %v649
        %v651 = vmul.f32 %v648, %v650
        %v652 = vadd.f32 %v648, %v651
        %vm653 = vweird.f32 %v604
        %vm654 = vweird.f32 %v648
        %vm655 = vmor %vm653, %vm654
        %v656 = vsel %vm655, %v648, %v652
        %v657 = vand.u32 2147483647, %v604
        %vm658 = vcmp.eq.f32.partialorder %v657, 8.507059e+37
        %v659 = vand.u32 %v604, 2147483648
        %v660 = vor.u32 1.1754944e-38, %v659
        %v661 = vsel %vm658, %v660, %v656
        %v662 = vmul.f32 1.0, %v661
        %v663 = vrcp.pop %v605
        %v664 = vmul.f32 %v605, %v663
        %v665 = vsub.f32 1.0, %v664
        %v666 = vmul.f32 %v663, %v665
        %v667 = vadd.f32 %v663, %v666
        %vm668 = vweird.f32 %v605
        %vm669 = vweird.f32 %v663
        %vm670 = vmor %vm668, %vm669
        %v671 = vsel %vm670, %v663, %v667
        %v672 = vand.u32 2147483647, %v605
        %vm673 = vcmp.eq.f32.partialorder %v672, 8.507059e+37
        %v674 = vand.u32 %v605, 2147483648
        %v675 = vor.u32 1.1754944e-38, %v674
        %v676 = vsel %vm673, %v675, %v671
        %v677 = vmul.f32 1.0, %v676
        %v678 = vrcp.pop %v606
        %v679 = vmul.f32 %v606, %v678
        %v680 = vsub.f32 1.0, %v679
        %v681 = vmul.f32 %v678, %v680
        %v682 = vadd.f32 %v678, %v681
        %vm683 = vweird.f32 %v606
        %vm684 = vweird.f32 %v678
        %vm685 = vmor %vm683, %vm684
        %v686 = vsel %vm685, %v678, %v682
        %v687 = vand.u32 2147483647, %v606
        %vm688 = vcmp.eq.f32.partialorder %v687, 8.507059e+37
        %v689 = vand.u32 %v606, 2147483648
        %v690 = vor.u32 1.1754944e-38, %v689
        %v691 = vsel %vm688, %v690, %v686
        %v692 = vmul.f32 1.0, %v691
        %v693 = vrcp.pop %v607
        %v694 = vmul.f32 %v607, %v693
        %v695 = vsub.f32 1.0, %v694
        %v696 = vmul.f32 %v693, %v695
        %v697 = vadd.f32 %v693, %v696
        %vm698 = vweird.f32 %v607
        %vm699 = vweird.f32 %v693
        %vm700 = vmor %vm698, %vm699
        %v701 = vsel %vm700, %v693, %v697
        %v702 = vand.u32 2147483647, %v607
        %vm703 = vcmp.eq.f32.partialorder %v702, 8.507059e+37
        %v704 = vand.u32 %v607, 2147483648
        %v705 = vor.u32 1.1754944e-38, %v704
        %v706 = vsel %vm703, %v705, %v701
        %v707 = vmul.f32 1.0, %v706
        %v708 = vrcp.pop %v608
        %v709 = vmul.f32 %v608, %v708
        %v710 = vsub.f32 1.0, %v709
        %v711 = vmul.f32 %v708, %v710
        %v712 = vadd.f32 %v708, %v711
        %vm713 = vweird.f32 %v608
        %vm714 = vweird.f32 %v708
        %vm715 = vmor %vm713, %vm714
        %v716 = vsel %vm715, %v708, %v712
        %v717 = vand.u32 2147483647, %v608
        %vm718 = vcmp.eq.f32.partialorder %v717, 8.507059e+37
        %v719 = vand.u32 %v608, 2147483648
        %v720 = vor.u32 1.1754944e-38, %v719
        %v721 = vsel %vm718, %v720, %v716
        %v722 = vmul.f32 1.0, %v721
        %v723 = vrcp.pop %v609
        %v724 = vmul.f32 %v609, %v723
        %v725 = vsub.f32 1.0, %v724
        %v726 = vmul.f32 %v723, %v725
        %v727 = vadd.f32 %v723, %v726
        %vm728 = vweird.f32 %v609
        %vm729 = vweird.f32 %v723
        %vm730 = vmor %vm728, %vm729
        %v731 = vsel %vm730, %v723, %v727
        %v732 = vand.u32 2147483647, %v609
        %vm733 = vcmp.eq.f32.partialorder %v732, 8.507059e+37
        %v734 = vand.u32 %v609, 2147483648
        %v735 = vor.u32 1.1754944e-38, %v734
        %v736 = vsel %vm733, %v735, %v731
        %v737 = vmul.f32 1.0, %v736
        %v738 = vrcp.pop %v610
        %v739 = vmul.f32 %v610, %v738
        %v740 = vsub.f32 1.0, %v739
        %v741 = vmul.f32 %v738, %v740
        %v742 = vadd.f32 %v738, %v741
        %vm743 = vweird.f32 %v610
        %vm744 = vweird.f32 %v738
        %vm745 = vmor %vm743, %vm744
        %v746 = vsel %vm745, %v738, %v742
        %v747 = vand.u32 2147483647, %v610
        %vm748 = vcmp.eq.f32.partialorder %v747, 8.507059e+37
        %v749 = vand.u32 %v610, 2147483648
        %v750 = vor.u32 1.1754944e-38, %v749
        %v751 = vsel %vm748, %v750, %v746
        %v752 = vmul.f32 1.0, %v751
        %v753 = vrcp.pop %v611
        %v754 = vmul.f32 %v611, %v753
        %v755 = vsub.f32 1.0, %v754
        %v756 = vmul.f32 %v753, %v755
        %v757 = vadd.f32 %v753, %v756
        %vm758 = vweird.f32 %v611
        %vm759 = vweird.f32 %v753
        %vm760 = vmor %vm758, %vm759
        %v761 = vsel %vm760, %v753, %v757
        %v762 = vand.u32 2147483647, %v611
        %vm763 = vcmp.eq.f32.partialorder %v762, 8.507059e+37
        %v764 = vand.u32 %v611, 2147483648
        %v765 = vor.u32 1.1754944e-38, %v764
        %v766 = vsel %vm763, %v765, %v761
        %v767 = vmul.f32 1.0, %v766
        %v768 = vrcp.pop %v612
        %v769 = vmul.f32 %v612, %v768
        %v770 = vsub.f32 1.0, %v769
        %v771 = vmul.f32 %v768, %v770
        %v772 = vadd.f32 %v768, %v771
        %vm773 = vweird.f32 %v612
        %vm774 = vweird.f32 %v768
        %vm775 = vmor %vm773, %vm774
        %v776 = vsel %vm775, %v768, %v772
        %v777 = vand.u32 2147483647, %v612
        %vm778 = vcmp.eq.f32.partialorder %v777, 8.507059e+37
        %v779 = vand.u32 %v612, 2147483648
        %v780 = vor.u32 1.1754944e-38, %v779
        %v781 = vsel %vm778, %v780, %v776
        %v782 = vmul.f32 1.0, %v781
        %v783 = vrcp.pop %v613
        %v784 = vmul.f32 %v613, %v783
        %v785 = vsub.f32 1.0, %v784
        %v786 = vmul.f32 %v783, %v785
        %v787 = vadd.f32 %v783, %v786
        %vm788 = vweird.f32 %v613
        %vm789 = vweird.f32 %v783
        %vm790 = vmor %vm788, %vm789
        %v791 = vsel %vm790, %v783, %v787
        %v792 = vand.u32 2147483647, %v613
        %vm793 = vcmp.eq.f32.partialorder %v792, 8.507059e+37
        %v794 = vand.u32 %v613, 2147483648
        %v795 = vor.u32 1.1754944e-38, %v794
        %v796 = vsel %vm793, %v795, %v791
        %v797 = vmul.f32 1.0, %v796
        %v798 = vrcp.pop %v614
        %v799 = vmul.f32 %v614, %v798
        %v800 = vsub.f32 1.0, %v799
        %v801 = vmul.f32 %v798, %v800
        %v802 = vadd.f32 %v798, %v801
        %vm803 = vweird.f32 %v614
        %vm804 = vweird.f32 %v798
        %vm805 = vmor %vm803, %vm804
        %v806 = vsel %vm805, %v798, %v802
        %v807 = vand.u32 2147483647, %v614
        %vm808 = vcmp.eq.f32.partialorder %v807, 8.507059e+37
        %v809 = vand.u32 %v614, 2147483648
        %v810 = vor.u32 1.1754944e-38, %v809
        %v811 = vsel %vm808, %v810, %v806
        %v812 = vmul.f32 1.0, %v811
        %v813 = vrcp.pop %v615
        %v814 = vmul.f32 %v615, %v813
        %v815 = vsub.f32 1.0, %v814
        %v816 = vmul.f32 %v813, %v815
        %v817 = vadd.f32 %v813, %v816
        %vm818 = vweird.f32 %v615
        %vm819 = vweird.f32 %v813
        %vm820 = vmor %vm818, %vm819
        %v821 = vsel %vm820, %v813, %v817
        %v822 = vand.u32 2147483647, %v615
        %vm823 = vcmp.eq.f32.partialorder %v822, 8.507059e+37
        %v824 = vand.u32 %v615, 2147483648
        %v825 = vor.u32 1.1754944e-38, %v824
        %v826 = vsel %vm823, %v825, %v821
        %v827 = vmul.f32 1.0, %v826
        %v828 = vrcp.pop %v616
        %v829 = vmul.f32 %v616, %v828
        %v830 = vsub.f32 1.0, %v829
        %v831 = vmul.f32 %v828, %v830
        %v832 = vadd.f32 %v828, %v831
        %vm833 = vweird.f32 %v616
        %vm834 = vweird.f32 %v828
        %vm835 = vmor %vm833, %vm834
        %v836 = vsel %vm835, %v828, %v832
        %v837 = vand.u32 2147483647, %v616
        %vm838 = vcmp.eq.f32.partialorder %v837, 8.507059e+37
        %v839 = vand.u32 %v616, 2147483648
        %v840 = vor.u32 1.1754944e-38, %v839
        %v841 = vsel %vm838, %v840, %v836
        %v842 = vmul.f32 1.0, %v841
        %v843 = vrcp.pop %v617
        %v844 = vmul.f32 %v617, %v843
        %v845 = vsub.f32 1.0, %v844
        %v846 = vmul.f32 %v843, %v845
        %v847 = vadd.f32 %v843, %v846
        %vm848 = vweird.f32 %v617
        %vm849 = vweird.f32 %v843
        %vm850 = vmor %vm848, %vm849
        %v851 = vsel %vm850, %v843, %v847
        %v852 = vand.u32 2147483647, %v617
        %vm853 = vcmp.eq.f32.partialorder %v852, 8.507059e+37
        %v854 = vand.u32 %v617, 2147483648
        %v855 = vor.u32 1.1754944e-38, %v854
        %v856 = vsel %vm853, %v855, %v851
        %v857 = vmul.f32 1.0, %v856
        %v858 = vmul.f32 %v324, %v632
        %v859 = vmul.f32 %v365, %v647
        %v860 = vmul.f32 %v327, %v662
        %v861 = vmul.f32 %v368, %v677
        %v862 = vmul.f32 %v330, %v692
        %v863 = vmul.f32 %v371, %v707
        %v864 = vmul.f32 %v333, %v722
        %v865 = vmul.f32 %v374, %v737
        %v866 = vmul.f32 %v336, %v752
        %v867 = vmul.f32 %v377, %v767
        %v868 = vmul.f32 %v339, %v782
        %v869 = vmul.f32 %v380, %v797
        %v870 = vmul.f32 %v342, %v812
        %v871 = vmul.f32 %v383, %v827
        %v872 = vmul.f32 %v345, %v842
        %v873 = vmul.f32 %v386, %v857
        %v874 = vld [vmem:[#allocation7] sm:$0xff]
        %v875 = vld [vmem:[#allocation7 + $0x8] sm:$0xff]
        %v876 = vld [vmem:[#allocation7 + $0x10] sm:$0xff]
        %v877 = vld [vmem:[#allocation7 + $0x18] sm:$0xff]
        %v878 = vld [vmem:[#allocation7 + $0x20] sm:$0xff]
        %v879 = vld [vmem:[#allocation7 + $0x28] sm:$0xff]
        %v880 = vld [vmem:[#allocation7 + $0x30] sm:$0xff]
        %v881 = vld [vmem:[#allocation7 + $0x38] sm:$0xff]
        %v882 = vld [vmem:[#allocation7 + $0x40] sm:$0xff]
        %v883 = vld [vmem:[#allocation7 + $0x48] sm:$0xff]
        %v884 = vld [vmem:[#allocation7 + $0x50] sm:$0xff]
        %v885 = vld [vmem:[#allocation7 + $0x58] sm:$0xff]
        %v886 = vld [vmem:[#allocation7 + $0x60] sm:$0xff]
        %v887 = vld [vmem:[#allocation7 + $0x68] sm:$0xff]
        %v888 = vld [vmem:[#allocation7 + $0x70] sm:$0xff]
        %v889 = vld [vmem:[#allocation7 + $0x78] sm:$0xff]
        %v890 = vld [vmem:[#allocation7 + $0x80] sm:$0xff]
        %v891 = vld [vmem:[#allocation7 + $0x88] sm:$0xff]
        %v892 = vld [vmem:[#allocation7 + $0x90] sm:$0xff]
        %v893 = vld [vmem:[#allocation7 + $0x98] sm:$0xff]
        %v894 = vld [vmem:[#allocation7 + $0xa0] sm:$0xff]
        %v895 = vld [vmem:[#allocation7 + $0xa8] sm:$0xff]
        %v896 = vld [vmem:[#allocation7 + $0xb0] sm:$0xff]
        %v897 = vld [vmem:[#allocation7 + $0xb8] sm:$0xff]
        %v898 = vld [vmem:[#allocation7 + $0xc0] sm:$0xff]
        %v899 = vld [vmem:[#allocation7 + $0xc8] sm:$0xff]
        %v900 = vld [vmem:[#allocation7 + $0xd0] sm:$0xff]
        %v901 = vld [vmem:[#allocation7 + $0xd8] sm:$0xff]
        %v902 = vld [vmem:[#allocation7 + $0xe0] sm:$0xff]
        %v903 = vld [vmem:[#allocation7 + $0xe8] sm:$0xff]
        %v904 = vld [vmem:[#allocation7 + $0xf0] sm:$0xff]
        %v905 = vld [vmem:[#allocation7 + $0xf8] sm:$0xff]
        %906 = vmatpush.msra.mxu0 %v889
        %907 = vmatpush.msra.mxu0 %v888
        %908 = vmatpush.msra.mxu0 %v887
        %909 = vmatpush.msra.mxu0 %v886
        %910 = vmatpush.msra.mxu0 %v885
        %911 = vmatpush.msra.mxu0 %v884
        %912 = vmatpush.msra.mxu0 %v883
        %913 = vmatpush.msra.mxu0 %v882
        %914 = vmatpush.msra.mxu0 %v881
        %915 = vmatpush.msra.mxu0 %v880
        %916 = vmatpush.msra.mxu0 %v879
        %917 = vmatpush.msra.mxu0 %v878
        %918 = vmatpush.msra.mxu0 %v877
        %919 = vmatpush.msra.mxu0 %v876
        %920 = vmatpush.msra.mxu0 %v875
        %921 = vmatpush.msra.mxu0 %v874
        %922 = vmatmul.f32.gmra.mxu0 %v858
        %v923 = vpop.f32.mrf.mxu0
        %v924 = vadd.f32 0.0, %v923
        %925 = vmatmul.f32.gmra.mxu0 %v860
        %v926 = vpop.f32.mrf.mxu0
        %v927 = vadd.f32 0.0, %v926
        %928 = vmatmul.f32.gmra.mxu0 %v862
        %v929 = vpop.f32.mrf.mxu0
        %v930 = vadd.f32 0.0, %v929
        %931 = vmatmul.f32.gmra.mxu0 %v864
        %v932 = vpop.f32.mrf.mxu0
        %v933 = vadd.f32 0.0, %v932
        %934 = vmatmul.f32.gmra.mxu0 %v866
        %v935 = vpop.f32.mrf.mxu0
        %v936 = vadd.f32 0.0, %v935
        %937 = vmatmul.f32.gmra.mxu0 %v868
        %v938 = vpop.f32.mrf.mxu0
        %v939 = vadd.f32 0.0, %v938
        %940 = vmatmul.f32.gmra.mxu0 %v870
        %v941 = vpop.f32.mrf.mxu0
        %v942 = vadd.f32 0.0, %v941
        %943 = vmatmul.f32.gmra.mxu0 %v872
        %v944 = vpop.f32.mrf.mxu0
        %v945 = vadd.f32 0.0, %v944
        %946 = vdwg.mxu0
        %947 = vmatpush.msra.mxu0 %v905
        %948 = vmatpush.msra.mxu0 %v904
        %949 = vmatpush.msra.mxu0 %v903
        %950 = vmatpush.msra.mxu0 %v902
        %951 = vmatpush.msra.mxu0 %v901
        %952 = vmatpush.msra.mxu0 %v900
        %953 = vmatpush.msra.mxu0 %v899
        %954 = vmatpush.msra.mxu0 %v898
        %955 = vmatpush.msra.mxu0 %v897
        %956 = vmatpush.msra.mxu0 %v896
        %957 = vmatpush.msra.mxu0 %v895
        %958 = vmatpush.msra.mxu0 %v894
        %959 = vmatpush.msra.mxu0 %v893
        %960 = vmatpush.msra.mxu0 %v892
        %961 = vmatpush.msra.mxu0 %v891
        %962 = vmatpush.msra.mxu0 %v890
        %963 = vmatmul.f32.gmra.mxu0 %v859
        %v964 = vpop.f32.mrf.mxu0
        %v965 = vadd.f32 %v924, %v964
        %966 = vmatmul.f32.gmra.mxu0 %v861
        %v967 = vpop.f32.mrf.mxu0
        %v968 = vadd.f32 %v927, %v967
        %969 = vmatmul.f32.gmra.mxu0 %v863
        %v970 = vpop.f32.mrf.mxu0
        %v971 = vadd.f32 %v930, %v970
        %972 = vmatmul.f32.gmra.mxu0 %v865
        %v973 = vpop.f32.mrf.mxu0
        %v974 = vadd.f32 %v933, %v973
        %975 = vmatmul.f32.gmra.mxu0 %v867
        %v976 = vpop.f32.mrf.mxu0
        %v977 = vadd.f32 %v936, %v976
        %978 = vmatmul.f32.gmra.mxu0 %v869
        %v979 = vpop.f32.mrf.mxu0
        %v980 = vadd.f32 %v939, %v979
        %981 = vmatmul.f32.gmra.mxu0 %v871
        %v982 = vpop.f32.mrf.mxu0
        %v983 = vadd.f32 %v942, %v982
        %984 = vmatmul.f32.gmra.mxu0 %v873
        %v985 = vpop.f32.mrf.mxu0
        %v986 = vadd.f32 %v945, %v985
        %987 = vdwg.mxu0
        %988 = vst [vmem:[%s265] sm:$0xff] %v965
        %989 = vst [vmem:[%s265 + $0x8] sm:$0xff] %v968
        %990 = vst [vmem:[%s265 + $0x10] sm:$0xff] %v971
        %991 = vst [vmem:[%s265 + $0x18] sm:$0xff] %v974
        %992 = vst [vmem:[%s265 + $0x20] sm:$0xff] %v977
        %993 = vst [vmem:[%s265 + $0x28] sm:$0xff] %v980
        %994 = vst [vmem:[%s265 + $0x30] sm:$0xff] %v983
        %995 = vst [vmem:[%s265 + $0x38] sm:$0xff] %v986
        %s996 = sand.u32 %s120, 1
        %s997 = scalar_lea.sflag [#allocation4], %s996
        %s998 = sand.u32 %s120, 1
        %s999 = smul.addr %s998, 64
        %s1000 = scalar_lea.vmem [#allocation10], %s999
        // Predicated region
        $region53: #{tpu_custom_call.1} parent=35 // pred_check
          %p1001 = pneg %p130
        $region54: #{tpu_custom_call.1} parent=35 // pred_check_branch
          %1003 = sbr.rel (%p1001) target = $region56
        $region55: #{tpu_custom_call.1} parent=35 // pred_region
          %1005 = vsyncadd %s997, 0
          %s1006 = smul.addr %s23, 8
          %s1007 = smul.addr %s1006, 8
          %s1008 = scalar_lea.hbm %s4, %s1007
          %s1009 = sshll.u32 %s1000, 4
          %s1010 = int_to_ptr.vmem [resolvable:$true] %s1009
          %s1011 = sshll.u32 %s1008, 4
          %s1012 = int_to_ptr.hbm [resolvable:$true] %s1011
          %1017 = dma.vmem_to_hbm [thread:$0]  %s1010, 1024, %s1012, %s997, 128, 128, 8
        $region56: #{tpu_custom_call.1} parent=35 // pred_fallthru
          _
      $region36: #{tpu_custom_call.1} parent=5 // pred_fallthru
        _
      %p1018 = scmp.le.s32.totalorder 2, %s18
      // Predicated region
      $region57: #{tpu_custom_call.1} parent=5 // pred_check
        %p1019 = pneg %p1018
      $region58: #{tpu_custom_call.1} parent=5 // pred_check_branch
        %1021 = sbr.rel (%p1019) target = $region60
      $region59: #{tpu_custom_call.1} parent=5 // pred_region
        %s1022 = ssub.s32 %s18, 2
        // Predicated region
        $region61: #{tpu_custom_call.1} parent=59 // pred_check
          %p1023 = pneg %p136
        $region62: #{tpu_custom_call.1} parent=59 // pred_check_branch
          %1025 = sbr.rel (%p1023) target = $region64
        $region63: #{tpu_custom_call.1} parent=59 // pred_region
          %s1026 = sand.u32 %s121, 1
          %s1027 = scalar_lea.sflag [#allocation4], %s1026
          %s1028 = sand.u32 %s121, 1
          %s1029 = smul.addr %s1028, 64
          %s1030 = scalar_lea.vmem [#allocation10], %s1029
          %1032 = dma.done %s1027, 1024
        $region64: #{tpu_custom_call.1} parent=59 // pred_fallthru
          _
      $region60: #{tpu_custom_call.1} parent=5 // pred_fallthru
        _
    $region6: #{tpu_custom_call.1} parent=1 // loop_footer
      %s22 = sadd.s32 1, %s18
    $region7: #{tpu_custom_call.1} parent=1 // loop_footer_branch
      %17 = sbr.rel target = $region3
    $region8: #{tpu_custom_call.1} parent=1 // loop_exit
      _
    %1033 = vsyncpa [#allocation3], 1
    %s1034 = scalar_lea.sflag [#allocation3], 1
    %1035 = vsyncpa %s1034, 1
    %1036 = vsyncpa [#allocation6], 1
    %1037 = vsyncpa [#allocation9], 1
    %1038 = vsyncpa [#allocation4], 1
    %s1039 = scalar_lea.sflag [#allocation4], 1
    %1040 = vsyncpa %s1039, 1

</llo_original>
